<compile_context>
chip_gen: v7x
topology: tpu7x:2x2x1
jax: 0.10.0
libtpu: 0.0.40
codegen_flags: <defaults>
</compile_context>

<pallas_src>
import functools

import jax
import jax.numpy as jnp
from jax.experimental import pallas as pl
from jax.experimental.pallas import tpu as pltpu

B, C, N = 2, 4, 128          # batch, categories (softmax/one-hot dim=1), trailing length


def _int_pow(v, n):
    """v ** n for a small static positive integer n via repeated squaring (VPU only)."""
    acc = None
    base = v
    while n:
        if n & 1:
            acc = base if acc is None else acc * base
        n >>= 1
        if n:
            base = base * base
    return acc


def _gumbel_kernel(x_ref, u_ref, *out_refs, b, c, training, freeze, gumbel_temp, eps):
    """Packed (b*c, n) slab; each batch element occupies a contiguous group of c sublanes."""
    n = x_ref.shape[-1]
    bc = b * c

    x = x_ref[...]                                    # (b*c, n) — one full (8,128) vreg
    u = u_ref[...]
    g = -jnp.log(-jnp.log(u + eps) + eps)             # Gumbel(0,1) noise, full-vreg EUP ops
    z = x + g

    def seg_reduce(v, reducer):
        # per-batch (rows [i*c, (i+1)*c)) reduction, broadcast back to (b*c, n)
        parts = []
        for i in range(b):
            r = reducer(v[i * c:(i + 1) * c, :], axis=0, keepdims=True)   # (1, n)
            parts.append(jnp.broadcast_to(r, (c, n)))
        return parts[0] if b == 1 else jnp.concatenate(parts, axis=0)

    m = seg_reduce(z, jnp.max)                        # per-segment max, broadcast back
    zm = z - m                                        # <= 0 everywhere, == 0 at the max

    def make_onehot():
        # first-maximum tie-break (torch.max(dim=1) index semantics), int32 until the end
        cid = jax.lax.broadcasted_iota(jnp.int32, (bc, n), 0)
        ties = jnp.where(zm == 0.0, cid, bc)          # sentinel = bc (>= any row index)
        first = seg_reduce(ties, jnp.min)
        return (cid == first).astype(jnp.float32)

    def softmax_from(e):
        return e / seg_reduce(e, jnp.sum)

    if not training:                                  # eval: single one-hot output
        out_refs[0][...] = make_onehot()
        return

    sel_ref, rate_ref = out_refs
    hard_inv = 1.0 / 0.1                              # gumbel_hard_temp = 0.1
    if freeze:
        sel_ref[...] = make_onehot()
        rate_ref[...] = softmax_from(jnp.exp(zm * hard_inv))
    else:
        e_sel = jnp.exp(zm * (1.0 / gumbel_temp))
        sel_ref[...] = softmax_from(e_sel)
        ratio = gumbel_temp / 0.1
        r_int = int(round(ratio))
        if abs(ratio - r_int) < 1e-9 and 1 <= r_int <= 16:
            e_rate = _int_pow(e_sel, r_int)           # reuse exp: e**(gt/0.1) on the VPU
        else:
            e_rate = jnp.exp(zm * hard_inv)
        rate_ref[...] = softmax_from(e_rate)


def stochastic_gumbel_softmax(x, key, *, training=True, freeze=False,
                              gumbel_temp=1.0, eps=1e-8):
    """x: (B, C, N) float32, categorical axis dim=1.  Returns (selection, rate)."""
    b, c, n = x.shape
    u = jax.random.uniform(key, x.shape, jnp.float32)          # U[0,1), like torch.rand_like
    x2 = x.reshape(b * c, n)                                    # pack to one (8,128) vreg
    u2 = u.reshape(b * c, n)

    kernel = functools.partial(_gumbel_kernel, b=b, c=c, training=bool(training),
                               freeze=bool(freeze), gumbel_temp=float(gumbel_temp),
                               eps=float(eps))
    vmem = pl.BlockSpec(memory_space=pltpu.MemorySpace.VMEM)
    n_out = 1 if not training else 2

    out = pl.pallas_call(
        kernel,
        out_shape=tuple(jax.ShapeDtypeStruct((b * c, n), jnp.float32) for _ in range(n_out)),
        in_specs=[vmem, vmem],
        out_specs=tuple(vmem for _ in range(n_out)),
    )(x2, u2)

    if not training:
        oh = out[0].reshape(b, c, n)
        return oh, oh                                            # single store, aliased return
    sel, rate = out
    return sel.reshape(b, c, n), rate.reshape(b, c, n)


# ------------------------- pure-JAX reference (check) -------------------------
def ref_forward(x, u, *, training, freeze, gumbel_temp=1.0, eps=1e-8):
    g = -jnp.log(-jnp.log(u + eps) + eps)
    z = x + g
    m = jnp.max(z, axis=1, keepdims=True)
    cid = jax.lax.broadcasted_iota(jnp.int32, z.shape, 1)
    first = jnp.min(jnp.where(z == m, cid, z.shape[1]), axis=1, keepdims=True)
    onehot = (cid == first).astype(jnp.float32)

    def softmax(t):
        e = jnp.exp((z - m) / t)
        return e / jnp.sum(e, axis=1, keepdims=True)

    if not training:
        return onehot, onehot
    return (onehot if freeze else softmax(gumbel_temp)), softmax(0.1)


# ----------------------------------- main -------------------------------------
if __name__ == "__main__":
    root = jax.random.PRNGKey(0)
    kx, ku = jax.random.split(root)
    x = jax.random.normal(kx, (B, C, N), jnp.float32)

    fwd_train = jax.jit(functools.partial(stochastic_gumbel_softmax, training=True, freeze=False))
    fwd_freeze = jax.jit(functools.partial(stochastic_gumbel_softmax, training=True, freeze=True))
    fwd_eval = jax.jit(functools.partial(stochastic_gumbel_softmax, training=False, freeze=False))

    outs = {
        "train": fwd_train(x, ku),
        "freeze": fwd_freeze(x, ku),
        "eval": fwd_eval(x, ku),
    }
    jax.block_until_ready(outs)

    u = jax.random.uniform(ku, x.shape, jnp.float32)             # same noise the kernel used
    close = lambda a, b: bool(jnp.allclose(a, b, rtol=1e-4, atol=1e-5))

    for mode, (training, freeze) in [("train", (True, False)),
                                     ("freeze", (True, True)),
                                     ("eval", (False, False))]:
        sel, rate = outs[mode]
        assert sel.shape == rate.shape == (B, C, N)
        assert bool(jnp.all(jnp.isfinite(sel))) and bool(jnp.all(jnp.isfinite(rate))), \
            f"non-finite output ({mode})"

        ref_sel, ref_rate = ref_forward(x, u, training=training, freeze=freeze)
        assert close(sel, ref_sel), f"selection mismatch ({mode})"
        assert close(rate, ref_rate), f"rate mismatch ({mode})"

        # both outputs are distributions over dim=1
        assert close(jnp.sum(sel, axis=1), jnp.ones((B, N))), f"selection not normalized ({mode})"
        assert close(jnp.sum(rate, axis=1), jnp.ones((B, N))), f"rate not normalized ({mode})"
        if (not training) or freeze:
            assert bool(jnp.all((sel == 0.0) | (sel == 1.0))), f"one-hot not binary ({mode})"

    print("KERNEL_OK")
</pallas_src>

<mosaic_0001>
module attributes {stable_mosaic.version = 11 : i64} {
  func.func @_gumbel_kernel(%arg0: memref<8x128xf32, #tpu.memory_space<vmem>>, %arg1: memref<8x128xf32, #tpu.memory_space<vmem>>, %arg2: memref<8x128xf32, #tpu.memory_space<vmem>>, %arg3: memref<8x128xf32, #tpu.memory_space<vmem>>) attributes {dimension_semantics = [], scalar_prefetch = 0 : i64, scratch_operands = 0 : i64, tpu.core_type = #tpu.core_type<tc>} {
    %c0 = arith.constant 0 : index
    %c0_0 = arith.constant 0 : index
    %0 = vector.load %arg0[%c0, %c0_0] : memref<8x128xf32, #tpu.memory_space<vmem>>, vector<8x128xf32>
    %c0_1 = arith.constant 0 : index
    %c0_2 = arith.constant 0 : index
    %1 = vector.load %arg1[%c0_1, %c0_2] : memref<8x128xf32, #tpu.memory_space<vmem>>, vector<8x128xf32>
    %cst = arith.constant 9.99999993E-9 : f32
    %2 = vector.broadcast %cst : f32 to vector<8x128xf32>
    %3 = arith.addf %1, %2 : vector<8x128xf32>
    %4 = math.log %3 : vector<8x128xf32>
    %cst_3 = arith.constant 0.000000e+00 : f32
    %5 = vector.broadcast %cst_3 : f32 to vector<8x128xf32>
    %6 = arith.subf %5, %4 : vector<8x128xf32>
    %cst_4 = arith.constant 9.99999993E-9 : f32
    %7 = vector.broadcast %cst_4 : f32 to vector<8x128xf32>
    %8 = arith.addf %6, %7 : vector<8x128xf32>
    %9 = math.log %8 : vector<8x128xf32>
    %cst_5 = arith.constant 0.000000e+00 : f32
    %10 = vector.broadcast %cst_5 : f32 to vector<8x128xf32>
    %11 = arith.subf %10, %9 : vector<8x128xf32>
    %12 = arith.addf %0, %11 : vector<8x128xf32>
    %13 = vector.extract_strided_slice %12 {offsets = [0, 0], sizes = [4, 128], strides = [1, 1]} : vector<8x128xf32> to vector<4x128xf32>
    %cst_6 = arith.constant dense<0xFF800000> : vector<128xf32>
    %14 = vector.multi_reduction <maximumf>, %13, %cst_6 [0] : vector<4x128xf32> to vector<128xf32>
    %15 = vector.shape_cast %14 : vector<128xf32> to vector<1x128xf32>
    %16 = vector.shape_cast %15 : vector<1x128xf32> to vector<1x128xf32>
    %17 = vector.broadcast %16 : vector<1x128xf32> to vector<4x128xf32>
    %18 = vector.extract_strided_slice %12 {offsets = [4, 0], sizes = [4, 128], strides = [1, 1]} : vector<8x128xf32> to vector<4x128xf32>
    %cst_7 = arith.constant dense<0xFF800000> : vector<128xf32>
    %19 = vector.multi_reduction <maximumf>, %18, %cst_7 [0] : vector<4x128xf32> to vector<128xf32>
    %20 = vector.shape_cast %19 : vector<128xf32> to vector<1x128xf32>
    %21 = vector.shape_cast %20 : vector<1x128xf32> to vector<1x128xf32>
    %22 = vector.broadcast %21 : vector<1x128xf32> to vector<4x128xf32>
    %23 = tpu.concatenate %17, %22 in 0 : vector<4x128xf32>, vector<4x128xf32> -> vector<8x128xf32>
    %24 = arith.subf %12, %23 : vector<8x128xf32>
    %cst_8 = arith.constant 1.000000e+00 : f32
    %25 = vector.broadcast %cst_8 : f32 to vector<8x128xf32>
    %26 = arith.mulf %24, %25 : vector<8x128xf32>
    %27 = math.exp %26 : vector<8x128xf32>
    %28 = vector.extract_strided_slice %27 {offsets = [0, 0], sizes = [4, 128], strides = [1, 1]} : vector<8x128xf32> to vector<4x128xf32>
    %cst_9 = arith.constant dense<0.000000e+00> : vector<128xf32>
    %29 = vector.multi_reduction <add>, %28, %cst_9 [0] : vector<4x128xf32> to vector<128xf32>
    %30 = vector.shape_cast %29 : vector<128xf32> to vector<1x128xf32>
    %31 = vector.shape_cast %30 : vector<1x128xf32> to vector<1x128xf32>
    %32 = vector.broadcast %31 : vector<1x128xf32> to vector<4x128xf32>
    %33 = vector.extract_strided_slice %27 {offsets = [4, 0], sizes = [4, 128], strides = [1, 1]} : vector<8x128xf32> to vector<4x128xf32>
    %cst_10 = arith.constant dense<0.000000e+00> : vector<128xf32>
    %34 = vector.multi_reduction <add>, %33, %cst_10 [0] : vector<4x128xf32> to vector<128xf32>
    %35 = vector.shape_cast %34 : vector<128xf32> to vector<1x128xf32>
    %36 = vector.shape_cast %35 : vector<1x128xf32> to vector<1x128xf32>
    %37 = vector.broadcast %36 : vector<1x128xf32> to vector<4x128xf32>
    %38 = tpu.concatenate %32, %37 in 0 : vector<4x128xf32>, vector<4x128xf32> -> vector<8x128xf32>
    %39 = arith.divf %27, %38 : vector<8x128xf32>
    %c0_11 = arith.constant 0 : index
    %c0_12 = arith.constant 0 : index
    %40 = vector.load %arg2[%c0_11, %c0_12] : memref<8x128xf32, #tpu.memory_space<vmem>>, vector<8x128xf32>
    tpu.vector_store %arg2[%c0_11, %c0_12], %39 {strides = array<i32>} : memref<8x128xf32, #tpu.memory_space<vmem>>, vector<8x128xf32>,
    %41 = arith.mulf %27, %27 : vector<8x128xf32>
    %42 = arith.mulf %41, %41 : vector<8x128xf32>
    %43 = arith.mulf %42, %42 : vector<8x128xf32>
    %44 = arith.mulf %41, %43 : vector<8x128xf32>
    %45 = vector.extract_strided_slice %44 {offsets = [0, 0], sizes = [4, 128], strides = [1, 1]} : vector<8x128xf32> to vector<4x128xf32>
    %cst_13 = arith.constant dense<0.000000e+00> : vector<128xf32>
    %46 = vector.multi_reduction <add>, %45, %cst_13 [0] : vector<4x128xf32> to vector<128xf32>
    %47 = vector.shape_cast %46 : vector<128xf32> to vector<1x128xf32>
    %48 = vector.shape_cast %47 : vector<1x128xf32> to vector<1x128xf32>
    %49 = vector.broadcast %48 : vector<1x128xf32> to vector<4x128xf32>
    %50 = vector.extract_strided_slice %44 {offsets = [4, 0], sizes = [4, 128], strides = [1, 1]} : vector<8x128xf32> to vector<4x128xf32>
    %cst_14 = arith.constant dense<0.000000e+00> : vector<128xf32>
    %51 = vector.multi_reduction <add>, %50, %cst_14 [0] : vector<4x128xf32> to vector<128xf32>
    %52 = vector.shape_cast %51 : vector<128xf32> to vector<1x128xf32>
    %53 = vector.shape_cast %52 : vector<1x128xf32> to vector<1x128xf32>
    %54 = vector.broadcast %53 : vector<1x128xf32> to vector<4x128xf32>
    %55 = tpu.concatenate %49, %54 in 0 : vector<4x128xf32>, vector<4x128xf32> -> vector<8x128xf32>
    %56 = arith.divf %44, %55 : vector<8x128xf32>
    %c0_15 = arith.constant 0 : index
    %c0_16 = arith.constant 0 : index
    %57 = vector.load %arg3[%c0_15, %c0_16] : memref<8x128xf32, #tpu.memory_space<vmem>>, vector<8x128xf32>
    tpu.vector_store %arg3[%c0_15, %c0_16], %56 {strides = array<i32>} : memref<8x128xf32, #tpu.memory_space<vmem>>, vector<8x128xf32>,
    return
  }
}

</mosaic_0001>

<llo_original>
// kernel: stochastic_gumbel_softmax.1
$region0: #{stochastic_gumbel_softmax.1}
  #allocation0 [shape = 'u32[]', space=smem, size = 0x4, offset = 0x4, fixed_abs, tag = 'smem constant byte address 0x4 - core index']
  #allocation1 [shape = 'u32[144,128]{1,0:T(1,128)}', space=vmem, size = 0x12000, scoped, tag = 'internal scratch']
  %s0 = inlined_call_operand.vmem [shape: f32[8,128], index: 0, kind: input, shape index: {}]
  %s1 = inlined_call_operand.vmem [shape: f32[8,128], index: 1, kind: input, shape index: {}]
  %s2 = inlined_call_operand.hbm [shape: f32[8,128], index: 2, kind: output, shape index: {0}]
  %s3 = inlined_call_operand.hbm [shape: f32[8,128], index: 3, kind: output, shape index: {1}]
  %4 = xla_tuple %s2, %s3
  %s5 = sld [smem:[#allocation0]]
  $region26: #{stochastic_gumbel_softmax.1} parent=0
    _
  %s7 = ssub.s32 1, %s5
  %s8 = scalar_select 0, %s7, %s5
  $region1: #{stochastic_gumbel_softmax.1} parent=0
    #allocation2 [shape = 'u8[4096]{0}', space=vmem, size = 0x1000, scoped, tag = 'output window, operand 0, single buffered']
    #allocation3 [shape = 's32[1]{0}', space=sflag, size = 0x4, scoped, tag = 'scoped memory for stochastic_gumbel_softmax.1']
    #allocation4 [shape = 'u8[4096]{0}', space=vmem, size = 0x1000, scoped, tag = 'output window, operand 1, single buffered']
    #allocation5 [shape = 's32[1]{0}', space=sflag, size = 0x4, scoped, tag = 'scoped memory for stochastic_gumbel_softmax.1']
    %9 = vsyncpa [#allocation3], 0
    %10 = vsyncpa [#allocation5], 0
    // Predicated region
    $region2: #{stochastic_gumbel_softmax.1} parent=1 // pred_check
      _
    $region3: #{stochastic_gumbel_softmax.1} parent=1 // pred_check_branch
      %12 = sbr.rel (0) target = $region5
    $region4: #{stochastic_gumbel_softmax.1} parent=1 // pred_region
      _
    $region5: #{stochastic_gumbel_softmax.1} parent=1 // pred_fallthru
      _
    // Predicated region
    $region6: #{stochastic_gumbel_softmax.1} parent=1 // pred_check
      _
    $region7: #{stochastic_gumbel_softmax.1} parent=1 // pred_check_branch
      %14 = sbr.rel (0) target = $region9
    $region8: #{stochastic_gumbel_softmax.1} parent=1 // pred_region
      _
    $region9: #{stochastic_gumbel_softmax.1} parent=1 // pred_fallthru
      _
    %v15 = vld [vmem:[%s0] sm:$0xff]
    %v16 = vld [vmem:[%s1] sm:$0xff]
    %v17 = vadd.f32 %v16, 1e-08
    %v18 = vlog2.pop %v17
    %v19 = vmul.f32 %v18, 0.6931472
    %v20 = vsub.f32 0.0, %v19
    %v21 = vadd.f32 %v20, 1e-08
    %v22 = vlog2.pop %v21
    %v23 = vmul.f32 %v22, 0.6931472
    %v24 = vsub.f32 0.0, %v23
    %v25 = vadd.f32 %v15, %v24
    %vm26 = vcmask 1043456
    %v27 = vsel %vm26, %v25, -inf
    %v28 = vrot.slane %v27, 4
    %v29 = vmax.f32 %v27, %v28
    %v30 = vrot.slane %v29, 2
    %v31 = vmax.f32 %v29, %v30
    %v32 = vrot.slane %v31, 1
    %v33 = vmax.f32 %v31, %v32
    %vm34 = vcmask 1047556
    %v35 = vsel %vm34, %v25, -inf
    %v36 = vrot.slane %v35, 4
    %v37 = vmax.f32 %v35, %v36
    %v38 = vrot.slane %v37, 2
    %v39 = vmax.f32 %v37, %v38
    %v40 = vrot.slane %v39, 1
    %v41 = vmax.f32 %v39, %v40
    %v42 = vsel %vm26, %v33, %v41
    %v43 = vsub.f32 %v25, %v42
    %v44 = vmul.f32 %v43, 1.442695
    %v45 = vpow.pop %v44
    %v46 = vsel %vm26, %v45, 0.0
    %v47 = vrot.slane %v46, 4
    %v48 = vadd.f32 %v46, %v47
    %v49 = vrot.slane %v48, 2
    %v50 = vadd.f32 %v48, %v49
    %v51 = vrot.slane %v50, 1
    %v52 = vadd.f32 %v50, %v51
    %v54 = vrot.slane %v45, 4
    %v56 = vsel %vm26, %v54, 0.0
    %v57 = vrot.slane %v56, 4
    %v58 = vadd.f32 %v56, %v57
    %v59 = vrot.slane %v58, 2
    %v60 = vadd.f32 %v58, %v59
    %v61 = vrot.slane %v60, 1
    %v62 = vadd.f32 %v60, %v61
    %v63 = vsel %vm26, %v52, %v62
    %v64 = vrcp.pop %v63
    %v65 = vmul.f32 %v45, %v64
    %66 = vst [vmem:[#allocation2] sm:$0xff] %v65
    %v67 = vmul.f32 %v45, %v45
    %v68 = vmul.f32 %v67, %v67
    %v69 = vmul.f32 %v68, %v68
    %v70 = vmul.f32 %v67, %v69
    %v71 = vsel %vm26, %v70, 0.0
    %v72 = vrot.slane %v71, 4
    %v73 = vadd.f32 %v71, %v72
    %v74 = vrot.slane %v73, 2
    %v75 = vadd.f32 %v73, %v74
    %v76 = vrot.slane %v75, 1
    %v77 = vadd.f32 %v75, %v76
    %v79 = vrot.slane %v70, 4
    %v81 = vsel %vm26, %v79, 0.0
    %v82 = vrot.slane %v81, 4
    %v83 = vadd.f32 %v81, %v82
    %v84 = vrot.slane %v83, 2
    %v85 = vadd.f32 %v83, %v84
    %v86 = vrot.slane %v85, 1
    %v87 = vadd.f32 %v85, %v86
    %v88 = vsel %vm26, %v77, %v87
    %v89 = vrcp.pop %v88
    %v90 = vmul.f32 %v70, %v89
    %91 = vst [vmem:[#allocation4] sm:$0xff] %v90
    // Predicated region
    $region10: #{stochastic_gumbel_softmax.1} parent=1 // pred_check
      _
    $region11: #{stochastic_gumbel_softmax.1} parent=1 // pred_check_branch
      %93 = sbr.rel (0) target = $region13
    $region12: #{stochastic_gumbel_softmax.1} parent=1 // pred_region
      %s95 = ssub.s32 128, 128
      %96 = vsyncadd [#allocation3], %s95
      %s98 = sshll.u32 [#allocation2], 4
      %s99 = int_to_ptr.vmem [resolvable:$true] %s98
      %101 = dma.vmem_to_hbm [thread:$0]  %s99, 128, %s2, [#allocation3]
    $region13: #{stochastic_gumbel_softmax.1} parent=1 // pred_fallthru
      _
    // Predicated region
    $region14: #{stochastic_gumbel_softmax.1} parent=1 // pred_check
      _
    $region15: #{stochastic_gumbel_softmax.1} parent=1 // pred_check_branch
      %103 = sbr.rel (0) target = $region17
    $region16: #{stochastic_gumbel_softmax.1} parent=1 // pred_region
      %s105 = ssub.s32 128, 128
      %106 = vsyncadd [#allocation5], %s105
      %s108 = sshll.u32 [#allocation4], 4
      %s109 = int_to_ptr.vmem [resolvable:$true] %s108
      %111 = dma.vmem_to_hbm [thread:$0]  %s109, 128, %s3, [#allocation5]
    $region17: #{stochastic_gumbel_softmax.1} parent=1 // pred_fallthru
      _
    // Predicated region
    $region18: #{stochastic_gumbel_softmax.1} parent=1 // pred_check
      _
    $region19: #{stochastic_gumbel_softmax.1} parent=1 // pred_check_branch
      %113 = sbr.rel (0) target = $region21
    $region20: #{stochastic_gumbel_softmax.1} parent=1 // pred_region
      %114 = dma.done [#allocation3], 128
    $region21: #{stochastic_gumbel_softmax.1} parent=1 // pred_fallthru
      _
    // Predicated region
    $region22: #{stochastic_gumbel_softmax.1} parent=1 // pred_check
      _
    $region23: #{stochastic_gumbel_softmax.1} parent=1 // pred_check_branch
      %116 = sbr.rel (0) target = $region25
    $region24: #{stochastic_gumbel_softmax.1} parent=1 // pred_region
      %117 = dma.done [#allocation5], 128
    $region25: #{stochastic_gumbel_softmax.1} parent=1 // pred_fallthru
      _
    %118 = vsyncpa [#allocation3], 1
    %119 = vsyncpa [#allocation5], 1

</llo_original>
